<compile_context>
chip_gen: v5e
topology: v5e:2x2
jax: 0.10.0
libtpu: 0.0.40
codegen_flags: <defaults>
</compile_context>

<pallas_src>
import jax
import jax.numpy as jnp
from jax import lax
from jax.experimental import pallas as pl
from jax.experimental.pallas import tpu as pltpu

_LANE = 128             # vreg lane width
_PAD_SMALL_BATCH = 32768  # below this, a padded copy of x is negligible HBM traffic


def _net_kernel(x_ref, w1T_ref, b1_ref, w2_ref, b2_ref, oT_ref):
    # x_ref  : (tb, F)  untransposed batch tile, streamed per grid step
    # w1T_ref: (H, F)   resident across grid steps (torch Linear layout)
    # b1_ref : (H, 1)   resident
    # w2_ref : (H, 1)   resident
    # b2_ref : (1, 1)   SMEM scalar
    # oT_ref : (1, tb)  lane-dense store
    #
    # Layer 1 on the MXU: h^T = W1^T · x^T.  The x transpose is expressed via
    # the contraction dims, so it happens on-chip (VMEM/XLU/MXU feed), never
    # as an extra HBM pass in the wrapper.
    hT = lax.dot_general(
        w1T_ref[...], x_ref[...],
        dimension_numbers=(((1,), (1,)), ((), ())),   # contract both on F
        preferred_element_type=jnp.float32,
    )                                                  # (H, tb)
    hT = jnp.tanh(hT + b1_ref[...])
    # Layer 2 (single output unit): broadcast-multiply + sublane reduction
    # instead of an N=1 MXU matmul (saves a full MXU pass + result drain).
    outT = jnp.sum(hT * w2_ref[...], axis=0, keepdims=True) + b2_ref[0, 0]
    oT_ref[...] = jnp.maximum(outT, 0.0).astype(oT_ref.dtype)


def net_forward(x, w1, b1, w2, b2, *, batch_tile=16384):
    """x: (B, F) f32; w1: (F, H); b1: (1, H); w2: (H, 1); b2: (1, 1).
    Returns (B, 1) f32. Weights are the pre-transposed PyTorch Linear params."""
    B, F = x.shape
    Fw, H = w1.shape
    assert F == Fw and w2.shape == (H, 1) and b1.shape == (1, H) and b2.shape == (1, 1)
    assert batch_tile % _LANE == 0

    # Batch tile: big enough to amortize per-step pipeline overhead (>=8192 on
    # large B), small enough that two 8 MiB lane-padded x buffers plus
    # intermediates fit VMEM on v7x, and at most ~half the (rounded) batch so
    # the grid keeps >= 2 steps for megacore sharding on v7x.
    half = pl.cdiv(pl.cdiv(B, 2), _LANE) * _LANE
    tb = max(_LANE, min(batch_tile, half))

    grid_n = pl.cdiv(B, tb)
    Bp = grid_n * tb

    if Bp != B and B <= _PAD_SMALL_BATCH:
        # Small batch: a padded copy costs next to nothing and keeps every
        # block fully in-bounds.
        x_in = jnp.pad(x, ((0, Bp - B), (0, 0)))
        out_cols = Bp
    else:
        # Large batch: no extra HBM pass over x. A ragged final block is
        # handled by Pallas (OOB reads padded, OOB writes discarded); padded
        # columns never contaminate valid outputs since F is never tiled.
        x_in = x
        out_cols = B

    w1_t = w1.T               # (H, F) -- tiny, torch Linear layout
    b1_c = b1.reshape(H, 1)   # (H, 1)

    out_t = pl.pallas_call(
        _net_kernel,
        out_shape=jax.ShapeDtypeStruct((1, out_cols), jnp.float32),
        grid=(grid_n,),
        in_specs=[
            pl.BlockSpec((tb, F), lambda i: (i, 0)),            # x streams in, untransposed
            pl.BlockSpec((H, F), lambda i: (0, 0)),             # W1^T resident
            pl.BlockSpec((H, 1), lambda i: (0, 0)),             # b1 resident
            pl.BlockSpec((H, 1), lambda i: (0, 0)),             # w2 resident
            pl.BlockSpec(memory_space=pltpu.MemorySpace.SMEM),  # b2 scalar in SMEM
        ],
        out_specs=pl.BlockSpec((1, tb), lambda i: (0, i)),      # lane-dense output
        compiler_params=pltpu.CompilerParams(
            # batch tiles are independent -> shard across TCs on v7x megacore
            dimension_semantics=("parallel",),
            # headroom for double-buffered 8 MiB x tiles + intermediates;
            # fits v7x (64 MiB physical) and raises v5e's 16 MiB default.
            vmem_limit_bytes=48 * 1024 * 1024,
        ),
    )(x_in, w1_t, b1_c, w2, b2)

    return out_t[:, :B].reshape(B, 1)  # (1, B) is contiguous -> (B, 1) is a free reshape


def net_reference(x, w1, b1, w2, b2):
    h = jnp.tanh(x @ w1 + b1)
    return jnp.maximum(h @ w2 + b2, 0.0)


if __name__ == "__main__":
    # Small shapes consistent with the module: batch=8, n_feats=16, n_hid=32.
    B, n_feats, n_hid = 8, 16, 32

    key = jax.random.PRNGKey(0)
    kx, kw1, kb1, kw2, kb2 = jax.random.split(key, 5)

    x = jax.random.normal(kx, (B, n_feats), dtype=jnp.float32)
    # PyTorch Linear stores (out, in); we keep them pre-transposed for the kernel.
    w1 = jax.random.normal(kw1, (n_feats, n_hid), dtype=jnp.float32) * 0.1
    b1 = jax.random.normal(kb1, (1, n_hid), dtype=jnp.float32) * 0.1
    w2 = jax.random.normal(kw2, (n_hid, 1), dtype=jnp.float32) * 0.1
    b2 = jax.random.normal(kb2, (1, 1), dtype=jnp.float32) * 0.1

    out = jax.block_until_ready(net_forward(x, w1, b1, w2, b2))
    ref = net_reference(x, w1, b1, w2, b2)
    assert out.shape == (B, 1)
    assert jnp.allclose(out, ref, atol=1e-5, rtol=1e-5), (
        f"max err {jnp.max(jnp.abs(out - ref))}"
    )

    # Larger, non-aligned batch exercises the multi-step pipelined grid
    # (2 batch tiles -> megacore-shardable on v7x) and resident weights.
    B2 = 700
    x2 = jax.random.normal(jax.random.PRNGKey(1), (B2, n_feats), dtype=jnp.float32)
    out2 = jax.block_until_ready(net_forward(x2, w1, b1, w2, b2))
    ref2 = net_reference(x2, w1, b1, w2, b2)
    assert out2.shape == (B2, 1)
    assert jnp.allclose(out2, ref2, atol=1e-5, rtol=1e-5), (
        f"max err {jnp.max(jnp.abs(out2 - ref2))}"
    )

    print("KERNEL_OK")
</pallas_src>

<mosaic_0001>
module attributes {stable_mosaic.version = 11 : i64} {
  func.func @_net_kernel(%arg0: i32, %arg1: memref<128x16xf32, #tpu.memory_space<vmem>>, %arg2: memref<32x16xf32, #tpu.memory_space<vmem>>, %arg3: memref<32x1xf32, #tpu.memory_space<vmem>>, %arg4: memref<32x1xf32, #tpu.memory_space<vmem>>, %arg5: memref<1x1xf32, #tpu.memory_space<smem>>, %arg6: memref<1x128xf32, #tpu.memory_space<vmem>>) attributes {dimension_semantics = [#tpu.dimension_semantics<parallel>], iteration_bounds = array<i64: 1>, scalar_prefetch = 0 : i64, scratch_operands = 0 : i64, tpu.core_type = #tpu.core_type<tc>, window_params = [{transform_indices = @transform_0, window_bounds = array<i64: 128, 16>}, {pipeline_mode = #tpu.pipeline_mode<synchronous>, transform_indices = @transform_1, window_bounds = array<i64: 32, 16>}, {pipeline_mode = #tpu.pipeline_mode<synchronous>, transform_indices = @transform_2, window_bounds = array<i64: 32, 1>}, {pipeline_mode = #tpu.pipeline_mode<synchronous>, transform_indices = @transform_3, window_bounds = array<i64: 32, 1>}, {transform_indices = @transform_4, window_bounds = array<i64: 1, 1>}, {transform_indices = @transform_5, window_bounds = array<i64: 1, 128>}]} {
    %c0 = arith.constant 0 : index
    %c0_0 = arith.constant 0 : index
    %0 = vector.load %arg2[%c0, %c0_0] : memref<32x16xf32, #tpu.memory_space<vmem>>, vector<32x16xf32>
    %c0_1 = arith.constant 0 : index
    %c0_2 = arith.constant 0 : index
    %1 = vector.load %arg1[%c0_1, %c0_2] : memref<128x16xf32, #tpu.memory_space<vmem>>, vector<128x16xf32>
    %cst = arith.constant dense<0.000000e+00> : vector<32x128xf32>
    %2 = tpu.matmul %0, %1, %cst {dimension_numbers = #tpu.dot_dimension_numbers<[1], [1], [0], [0], [0, 0, 1, 0], [], []>} : vector<32x16xf32>, vector<128x16xf32>, vector<32x128xf32> -> vector<32x128xf32>
    %c0_3 = arith.constant 0 : index
    %c0_4 = arith.constant 0 : index
    %3 = vector.load %arg3[%c0_3, %c0_4] : memref<32x1xf32, #tpu.memory_space<vmem>>, vector<32x1xf32>
    %4 = vector.broadcast %3 : vector<32x1xf32> to vector<32x128xf32>
    %5 = arith.addf %2, %4 : vector<32x128xf32>
    %6 = math.tanh %5 : vector<32x128xf32>
    %c0_5 = arith.constant 0 : index
    %c0_6 = arith.constant 0 : index
    %7 = vector.load %arg4[%c0_5, %c0_6] : memref<32x1xf32, #tpu.memory_space<vmem>>, vector<32x1xf32>
    %8 = vector.broadcast %7 : vector<32x1xf32> to vector<32x128xf32>
    %9 = arith.mulf %6, %8 : vector<32x128xf32>
    %cst_7 = arith.constant dense<0.000000e+00> : vector<128xf32>
    %10 = vector.multi_reduction <add>, %9, %cst_7 [0] : vector<32x128xf32> to vector<128xf32>
    %11 = vector.shape_cast %10 : vector<128xf32> to vector<1x128xf32>
    %c0_8 = arith.constant 0 : index
    %c0_9 = arith.constant 0 : index
    %12 = memref.load %arg5[%c0_8, %c0_9] : memref<1x1xf32, #tpu.memory_space<smem>>
    %13 = vector.broadcast %12 : f32 to vector<1x128xf32>
    %14 = arith.addf %11, %13 : vector<1x128xf32>
    %cst_10 = arith.constant 0.000000e+00 : f32
    %15 = vector.broadcast %cst_10 : f32 to vector<1x128xf32>
    %16 = arith.maximumf %14, %15 : vector<1x128xf32>
    %c0_11 = arith.constant 0 : index
    %c0_12 = arith.constant 0 : index
    %17 = vector.load %arg6[%c0_11, %c0_12] : memref<1x128xf32, #tpu.memory_space<vmem>>, vector<1x128xf32>
    tpu.vector_store %arg6[%c0_11, %c0_12], %16 {strides = array<i32>} : memref<1x128xf32, #tpu.memory_space<vmem>>, vector<1x128xf32>,
    return
  }
  func.func @transform_0(%arg0: i32) -> (i32, i32) {
    %c0_i32 = arith.constant 0 : i32
    %c0_i32_0 = arith.constant 0 : i32
    return %arg0, %c0_i32 : i32, i32
  }
  func.func @transform_1(%arg0: i32) -> (i32, i32) {
    %c0_i32 = arith.constant 0 : i32
    %c0_i32_0 = arith.constant 0 : i32
    %c0_i32_1 = arith.constant 0 : i32
    return %c0_i32, %c0_i32_0 : i32, i32
  }
  func.func @transform_2(%arg0: i32) -> (i32, i32) {
    %c0_i32 = arith.constant 0 : i32
    %c0_i32_0 = arith.constant 0 : i32
    %c0_i32_1 = arith.constant 0 : i32
    return %c0_i32, %c0_i32_0 : i32, i32
  }
  func.func @transform_3(%arg0: i32) -> (i32, i32) {
    %c0_i32 = arith.constant 0 : i32
    %c0_i32_0 = arith.constant 0 : i32
    %c0_i32_1 = arith.constant 0 : i32
    return %c0_i32, %c0_i32_0 : i32, i32
  }
  func.func @transform_4(%arg0: i32) -> (i32, i32) {
    %c0_i32 = arith.constant 0 : i32
    %c0_i32_0 = arith.constant 0 : i32
    %c0_i32_1 = arith.constant 0 : i32
    return %c0_i32, %c0_i32_0 : i32, i32
  }
  func.func @transform_5(%arg0: i32) -> (i32, i32) {
    %c0_i32 = arith.constant 0 : i32
    %c0_i32_0 = arith.constant 0 : i32
    return %c0_i32, %arg0 : i32, i32
  }
}

</mosaic_0001>

<llo_original>
// kernel: tpu_custom_call.1
$region0: #{tpu_custom_call.1}
  #allocation0 [shape = 'u32[]', space=smem, size = 0x4, offset = 0x4, fixed_abs, tag = 'smem constant byte address 0x4 - core index']
  #allocation1 [shape = 'u32[72,128]{1,0:T(1,128)}', space=vmem, size = 0x9000, scoped, tag = 'internal scratch']
  #allocation2 [shape = 'f32[1,1]{1,0:T(1,128)S(6)}', space=smem, size = 0x200, scoped, tag = 'scoped memory for tpu_custom_call.1']
  %s0 = inlined_call_operand.vmem [shape: f32[128,16], index: 0, kind: input, shape index: {}]
  %s1 = inlined_call_operand.vmem [shape: f32[32,16], index: 1, kind: input, shape index: {}]
  %s2 = inlined_call_operand.vmem [shape: f32[32,1], index: 2, kind: input, shape index: {}]
  %s3 = inlined_call_operand.vmem [shape: f32[32,1], index: 3, kind: input, shape index: {}]
  %s4 = inlined_call_operand.<no memory space> [shape: f32[1,1], index: 4, kind: input, shape index: {}]
  %s5 = inlined_call_operand.hbm [shape: f32[1,128], index: 5, kind: output, shape index: {}]
  %s6 = sld [smem:[#allocation0]]
  $region30: #{tpu_custom_call.1} parent=0
    _
  %s8 = ssub.s32 1, %s6
  %s9 = scalar_select 0, %s8, %s6
  %10 = sst [smem:[#allocation2]] %s4
  $region1: #{tpu_custom_call.1} parent=0
    #allocation3 [shape = 'u8[512]{0}', space=vmem, size = 0x400, scoped, tag = 'output window, operand 0, single buffered']
    #allocation4 [shape = 's32[1]{0}', space=sflag, size = 0x4, scoped, tag = 'scoped memory for tpu_custom_call.1']
    %11 = vsyncpa [#allocation4], 0
    // Predicated region
    $region2: #{tpu_custom_call.1} parent=1 // pred_check
      _
    $region3: #{tpu_custom_call.1} parent=1 // pred_check_branch
      %13 = sbr.rel (0) target = $region5
    $region4: #{tpu_custom_call.1} parent=1 // pred_region
      _
    $region5: #{tpu_custom_call.1} parent=1 // pred_fallthru
      _
    // Predicated region
    $region6: #{tpu_custom_call.1} parent=1 // pred_check
      _
    $region7: #{tpu_custom_call.1} parent=1 // pred_check_branch
      %15 = sbr.rel (0) target = $region9
    $region8: #{tpu_custom_call.1} parent=1 // pred_region
      _
    $region9: #{tpu_custom_call.1} parent=1 // pred_fallthru
      _
    // Predicated region
    $region10: #{tpu_custom_call.1} parent=1 // pred_check
      _
    $region11: #{tpu_custom_call.1} parent=1 // pred_check_branch
      %17 = sbr.rel (0) target = $region13
    $region12: #{tpu_custom_call.1} parent=1 // pred_region
      _
    $region13: #{tpu_custom_call.1} parent=1 // pred_fallthru
      _
    // Predicated region
    $region14: #{tpu_custom_call.1} parent=1 // pred_check
      _
    $region15: #{tpu_custom_call.1} parent=1 // pred_check_branch
      %19 = sbr.rel (0) target = $region17
    $region16: #{tpu_custom_call.1} parent=1 // pred_region
      _
    $region17: #{tpu_custom_call.1} parent=1 // pred_fallthru
      _
    // Predicated region
    $region18: #{tpu_custom_call.1} parent=1 // pred_check
      _
    $region19: #{tpu_custom_call.1} parent=1 // pred_check_branch
      %21 = sbr.rel (0) target = $region21
    $region20: #{tpu_custom_call.1} parent=1 // pred_region
      _
    $region21: #{tpu_custom_call.1} parent=1 // pred_fallthru
      _
    %v22 = vld [vmem:[%s1] sm:$0xff]
    %v23 = vld [vmem:[%s1 + $0x8] sm:$0xff]
    %v24 = vld [vmem:[%s1 + $0x10] sm:$0xff]
    %v25 = vld [vmem:[%s1 + $0x18] sm:$0xff]
    %v26 = vld [vmem:[%s0] sm:$0xff]
    %v27 = vld [vmem:[%s0 + $0x8] sm:$0xff]
    %v28 = vld [vmem:[%s0 + $0x10] sm:$0xff]
    %v29 = vld [vmem:[%s0 + $0x18] sm:$0xff]
    %v30 = vld [vmem:[%s0 + $0x20] sm:$0xff]
    %v31 = vld [vmem:[%s0 + $0x28] sm:$0xff]
    %v32 = vld [vmem:[%s0 + $0x30] sm:$0xff]
    %v33 = vld [vmem:[%s0 + $0x38] sm:$0xff]
    %v34 = vld [vmem:[%s0 + $0x40] sm:$0xff]
    %v35 = vld [vmem:[%s0 + $0x48] sm:$0xff]
    %v36 = vld [vmem:[%s0 + $0x50] sm:$0xff]
    %v37 = vld [vmem:[%s0 + $0x58] sm:$0xff]
    %v38 = vld [vmem:[%s0 + $0x60] sm:$0xff]
    %v39 = vld [vmem:[%s0 + $0x68] sm:$0xff]
    %v40 = vld [vmem:[%s0 + $0x70] sm:$0xff]
    %v41 = vld [vmem:[%s0 + $0x78] sm:$0xff]
    %v42 = vld [vmem:[%s2] sm:$0xff]
    %v43 = vld [vmem:[%s2 + $0x8] sm:$0xff]
    %v44 = vld [vmem:[%s2 + $0x10] sm:$0xff]
    %v45 = vld [vmem:[%s2 + $0x18] sm:$0xff]
    %47 = vset.pattern.permute.xlu0 0
    %48 = vperm.xlu0 %47, %v42
    %v49 = vpop.permute.xlu0 %48
    %52 = vset.pattern.permute.xlu0 0
    %53 = vperm.xlu0 %52, %v43
    %v54 = vpop.permute.xlu0 %53
    %57 = vset.pattern.permute.xlu0 0
    %58 = vperm.xlu0 %57, %v44
    %v59 = vpop.permute.xlu0 %58
    %62 = vset.pattern.permute.xlu0 0
    %63 = vperm.xlu0 %62, %v45
    %v64 = vpop.permute.xlu0 %63
    %vm66 = vcmask 130048
    %v68 = vsel %vm66, %v22, 0
    %v71 = vsel %vm66, %v23, 0
    %v74 = vsel %vm66, %v24, 0
    %v77 = vsel %vm66, %v25, 0
    %v80 = vsel %vm66, %v26, 0
    %v83 = vsel %vm66, %v27, 0
    %v86 = vsel %vm66, %v28, 0
    %v89 = vsel %vm66, %v29, 0
    %v92 = vsel %vm66, %v30, 0
    %v95 = vsel %vm66, %v31, 0
    %v98 = vsel %vm66, %v32, 0
    %v101 = vsel %vm66, %v33, 0
    %v104 = vsel %vm66, %v34, 0
    %v107 = vsel %vm66, %v35, 0
    %v110 = vsel %vm66, %v36, 0
    %v113 = vsel %vm66, %v37, 0
    %v116 = vsel %vm66, %v38, 0
    %v119 = vsel %vm66, %v39, 0
    %v122 = vsel %vm66, %v40, 0
    %v125 = vsel %vm66, %v41, 0
    %127 = vmatpush.xpose.msra.mxu0 %v125
    %128 = vmatpush.xpose.msra.mxu0 %v122
    %129 = vmatpush.xpose.msra.mxu0 %v119
    %130 = vmatpush.xpose.msra.mxu0 %v116
    %131 = vmatpush.xpose.msra.mxu0 %v113
    %132 = vmatpush.xpose.msra.mxu0 %v110
    %133 = vmatpush.xpose.msra.mxu0 %v107
    %134 = vmatpush.xpose.msra.mxu0 %v104
    %135 = vmatpush.xpose.msra.mxu0 %v101
    %136 = vmatpush.xpose.msra.mxu0 %v98
    %137 = vmatpush.xpose.msra.mxu0 %v95
    %138 = vmatpush.xpose.msra.mxu0 %v92
    %139 = vmatpush.xpose.msra.mxu0 %v89
    %140 = vmatpush.xpose.msra.mxu0 %v86
    %141 = vmatpush.xpose.msra.mxu0 %v83
    %142 = vmatpush.xpose.msra.mxu0 %v80
    %143 = vmatmul.f32.gmra.mxu0 %v68
    %v144 = vpop.f32.mrf.mxu0
    %v145 = vadd.f32 %v49, %v144
    %146 = vmatmul.f32.gmra.mxu0 %v71
    %v147 = vpop.f32.mrf.mxu0
    %v148 = vadd.f32 %v54, %v147
    %149 = vmatmul.f32.gmra.mxu0 %v74
    %v150 = vpop.f32.mrf.mxu0
    %v151 = vadd.f32 %v59, %v150
    %152 = vmatmul.f32.gmra.mxu0 %v77
    %v153 = vpop.f32.mrf.mxu0
    %v154 = vadd.f32 %v64, %v153
    %155 = vdwg.mxu0
    %v156 = vtanh.pop %v145
    %v157 = vtanh.pop %v148
    %v158 = vtanh.pop %v151
    %v159 = vtanh.pop %v154
    %v160 = vld [vmem:[%s3] sm:$0xff]
    %v161 = vld [vmem:[%s3 + $0x8] sm:$0xff]
    %v162 = vld [vmem:[%s3 + $0x10] sm:$0xff]
    %v163 = vld [vmem:[%s3 + $0x18] sm:$0xff]
    %165 = vset.pattern.permute.xlu0 0
    %166 = vperm.xlu0 %165, %v160
    %v167 = vpop.permute.xlu0 %166
    %170 = vset.pattern.permute.xlu0 0
    %171 = vperm.xlu0 %170, %v161
    %v172 = vpop.permute.xlu0 %171
    %175 = vset.pattern.permute.xlu0 0
    %176 = vperm.xlu0 %175, %v162
    %v177 = vpop.permute.xlu0 %176
    %180 = vset.pattern.permute.xlu0 0
    %181 = vperm.xlu0 %180, %v163
    %v182 = vpop.permute.xlu0 %181
    %v184 = vmul.f32 %v156, %v167
    %v185 = vmul.f32 %v157, %v172
    %v186 = vmul.f32 %v158, %v177
    %v187 = vmul.f32 %v159, %v182
    %v188 = vadd.f32 %v184, %v185
    %v189 = vadd.f32 %v188, %v186
    %v190 = vadd.f32 %v189, %v187
    %v191 = vrot.slane %v190, 4
    %v192 = vadd.f32 %v190, %v191
    %v193 = vrot.slane %v192, 2
    %v194 = vadd.f32 %v192, %v193
    %v195 = vrot.slane %v194, 1
    %v196 = vadd.f32 %v194, %v195
    %s197 = sld [smem:[#allocation2]]
    %v198 = vstv %s197
    %v199 = vadd.f32 %v196, %v198
    %v200 = vmax.f32 %v199, 0.0
    %201 = vst [vmem:[#allocation3] sm:$0x1] %v200
    // Predicated region
    $region22: #{tpu_custom_call.1} parent=1 // pred_check
      _
    $region23: #{tpu_custom_call.1} parent=1 // pred_check_branch
      %203 = sbr.rel (0) target = $region25
    $region24: #{tpu_custom_call.1} parent=1 // pred_region
      %205 = vsyncadd [#allocation4], 0
      %s207 = sshll.u32 [#allocation3], 4
      %s208 = int_to_ptr.vmem [resolvable:$true] %s207
      %s209 = sshll.u32 %s5, 4
      %s210 = int_to_ptr.hbm [resolvable:$true] %s209
      %212 = dma.vmem_to_hbm [thread:$0]  %s208, 16, %s210, [#allocation4]
    $region25: #{tpu_custom_call.1} parent=1 // pred_fallthru
      _
    // Predicated region
    $region26: #{tpu_custom_call.1} parent=1 // pred_check
      _
    $region27: #{tpu_custom_call.1} parent=1 // pred_check_branch
      %214 = sbr.rel (0) target = $region29
    $region28: #{tpu_custom_call.1} parent=1 // pred_region
      %216 = dma.done [#allocation4], 16
    $region29: #{tpu_custom_call.1} parent=1 // pred_fallthru
      _
    %217 = vsyncpa [#allocation4], 1

</llo_original>
